<compile_context>
chip_gen: v7x
topology: tpu7x:2x2x1
jax: 0.10.0
libtpu: 0.0.40
codegen_flags: <defaults>
</compile_context>

<pallas_src>
import functools

import jax
import jax.numpy as jnp
from jax.experimental import pallas as pl
from jax.experimental.pallas import tpu as pltpu


# ----------------------------------------------------------------------------
# Glue: euler angles ('ZYX' convention, matching the PyTorch module) -> 3x3
# ----------------------------------------------------------------------------
def _axis_angle_rotation(axis: str, angle: jnp.ndarray) -> jnp.ndarray:
    cos = jnp.cos(angle)
    sin = jnp.sin(angle)
    one = jnp.ones_like(angle)
    zero = jnp.zeros_like(angle)
    if axis == "X":
        flat = (one, zero, zero, zero, cos, -sin, zero, sin, cos)
    elif axis == "Y":
        flat = (cos, zero, sin, zero, one, zero, -sin, zero, cos)
    elif axis == "Z":
        flat = (cos, -sin, zero, sin, cos, zero, zero, zero, one)
    else:
        raise ValueError(axis)
    return jnp.stack(flat, axis=-1).reshape(angle.shape + (3, 3))


def euler_angles_to_matrix_zyx(euler_angles: jnp.ndarray) -> jnp.ndarray:
    """euler_angles: (..., 3) -> rotation matrices (..., 3, 3), convention 'ZYX'."""
    rz = _axis_angle_rotation("Z", euler_angles[..., 0])
    ry = _axis_angle_rotation("Y", euler_angles[..., 1])
    rx = _axis_angle_rotation("X", euler_angles[..., 2])
    return rz @ ry @ rx


def _cdiv(a: int, b: int) -> int:
    return -(-a // b)


def _round_up(x: int, m: int) -> int:
    return ((x + m - 1) // m) * m


# ----------------------------------------------------------------------------
# Pallas kernel
#   params_ref: (B_pad*12,) f32 SMEM  -> per item: [r00..r22, tx, ty, tz]
#   pos_ref:    (TB, 3, TS, 128) VMEM -> dense coordinate planes, lanes = points
#   o_ref:      (TB, 3, TS, 128) VMEM
# ----------------------------------------------------------------------------
def _transform_kernel(params_ref, pos_ref, o_ref, *, tb: int):
    gb = pl.program_id(0)
    for bi in range(tb):  # tb is a small compile-time constant (<= 8)
        base = (gb * tb + bi) * 12

        x = pos_ref[bi, 0].astype(jnp.float32)   # (TS, 128), vreg-dense
        y = pos_ref[bi, 1].astype(jnp.float32)
        z = pos_ref[bi, 2].astype(jnp.float32)

        r00 = params_ref[base + 0]
        r01 = params_ref[base + 1]
        r02 = params_ref[base + 2]
        r10 = params_ref[base + 3]
        r11 = params_ref[base + 4]
        r12 = params_ref[base + 5]
        r20 = params_ref[base + 6]
        r21 = params_ref[base + 7]
        r22 = params_ref[base + 8]
        tx = params_ref[base + 9]
        ty = params_ref[base + 10]
        tz = params_ref[base + 11]

        # Per-plane unmasked stores (no sublane concatenate).
        o_ref[bi, 0] = (r00 * x + r01 * y + r02 * z + tx).astype(o_ref.dtype)
        o_ref[bi, 1] = (r10 * x + r11 * y + r12 * z + ty).astype(o_ref.dtype)
        o_ref[bi, 2] = (r20 * x + r21 * y + r22 * z + tz).astype(o_ref.dtype)


# ----------------------------------------------------------------------------
# Coordinate-major entry point: pos_cm is (B, 3, N), returns (B, 3, N).
# No transposes -- use this directly if the producer/consumer is coordinate-
# major; the (B, N, 3) wrapper below only adds the layout conversion.
# ----------------------------------------------------------------------------
def transformation_forward_coord_major(pos_cm, R, t, *,
                                       target_points_per_step: int = 65536,
                                       max_tb: int = 8):
    B, _, N = pos_cm.shape
    dtype = pos_cm.dtype
    itemsize = jnp.dtype(dtype).itemsize
    sub = {4: 8, 2: 16, 1: 32}.get(itemsize, 8)   # sublane tiling per dtype width

    # ---- tile the point axis (rows of 128 lanes) ----
    S = _cdiv(N, 128)
    ts_cap = max(sub, target_points_per_step // 128)
    if S <= ts_cap:
        ts, n_tiles_s, s_pad = S, 1, S            # single block == full dim
    else:
        n_tiles_s = _cdiv(S, ts_cap)
        ts = _round_up(_cdiv(S, n_tiles_s), sub)  # balanced tiles, sublane aligned
        s_pad = n_tiles_s * ts

    # ---- batch items per grid step (amortize per-step overhead at small N) ----
    pts_per_item = ts * 128
    tb = max(1, min(B, max_tb, target_points_per_step // pts_per_item))
    if n_tiles_s == 1 and B > 1:
        # keep >= 2 grid steps so both v7x TensorCores get work
        tb = min(tb, _cdiv(B, 2))
    n_tiles_b = _cdiv(B, tb)
    b_pad = n_tiles_b * tb

    # ---- per-item scalars: flat 1-D f32 SMEM array (no 2-D SMEM padding) ----
    rmat = euler_angles_to_matrix_zyx(R.astype(jnp.float32))            # (B, 3, 3)
    params = jnp.concatenate(
        [rmat.reshape(B, 9), t.astype(jnp.float32).reshape(B, 3)], axis=-1)
    if b_pad != B:
        params = jnp.pad(params, ((0, b_pad - B), (0, 0)))
    params = params.reshape(b_pad * 12)                                 # (B_pad*12,)

    # ---- pad / reshape points to (B_pad, 3, S_pad, 128) in the input dtype ----
    n_pad = s_pad * 128
    x = pos_cm
    if b_pad != B or n_pad != N:
        x = jnp.pad(x, ((0, b_pad - B), (0, 0), (0, n_pad - N)))
    x = x.reshape(b_pad, 3, s_pad, 128)

    kernel = functools.partial(_transform_kernel, tb=tb)
    out = pl.pallas_call(
        kernel,
        out_shape=jax.ShapeDtypeStruct((b_pad, 3, s_pad, 128), dtype),
        grid_spec=pltpu.PrefetchScalarGridSpec(
            num_scalar_prefetch=0,
            grid=(n_tiles_b, n_tiles_s),
            in_specs=[
                pl.BlockSpec(memory_space=pltpu.MemorySpace.SMEM),
                pl.BlockSpec((tb, 3, ts, 128), lambda gb, gs: (gb, 0, gs, 0)),
            ],
            out_specs=pl.BlockSpec((tb, 3, ts, 128), lambda gb, gs: (gb, 0, gs, 0)),
        ),
        compiler_params=pltpu.CompilerParams(
            dimension_semantics=("parallel", "parallel"),
        ),
        cost_estimate=pl.CostEstimate(
            flops=18 * B * N,
            transcendentals=0,
            bytes_accessed=2 * 3 * B * N * itemsize,
        ),
    )(params, x)

    out = out.reshape(b_pad, 3, n_pad)[:B, :, :N]
    return out


# ----------------------------------------------------------------------------
# Module-contract entry point: pos is (B, N, 3), returns (B, N, 3)
# ----------------------------------------------------------------------------
def transformation_forward(pos, R, t, **kwargs):
    # TODO(synk): the two transposes below are full HBM passes on the same data
    # the kernel touches; if the producer/consumer can keep points
    # coordinate-major (B, 3, N), call transformation_forward_coord_major
    # directly and skip them.
    pos_cm = jnp.transpose(pos, (0, 2, 1))                              # (B, 3, N)
    out_cm = transformation_forward_coord_major(pos_cm, R, t, **kwargs)
    return jnp.transpose(out_cm, (0, 2, 1)).astype(pos.dtype)           # (B, N, 3)


# ----------------------------------------------------------------------------
# Pure-JAX reference (mirrors the PyTorch forward) for correctness checks
# ----------------------------------------------------------------------------
def _reference(pos, R, t):
    outs = []
    for i in range(pos.shape[0]):
        T_align = euler_angles_to_matrix_zyx(R[i].astype(jnp.float32))
        outs.append((T_align @ pos[i].astype(jnp.float32).T).T
                    + t[i].astype(jnp.float32))
    return jnp.stack(outs, axis=0)


def _check(B, N, key, **kwargs):
    k1, k2, k3 = jax.random.split(key, 3)
    pos = jax.random.normal(k1, (B, N, 3), dtype=jnp.float32)
    R = jax.random.uniform(k2, (B, 3), dtype=jnp.float32,
                           minval=-jnp.pi, maxval=jnp.pi)
    t = jax.random.normal(k3, (B, 3), dtype=jnp.float32)
    out = jax.block_until_ready(transformation_forward(pos, R, t, **kwargs))
    ref = _reference(pos, R, t)
    assert out.shape == (B, N, 3)
    assert jnp.allclose(out, ref, atol=1e-5, rtol=1e-5), f"mismatch B={B} N={N}"
    return out


if __name__ == "__main__":
    key = jax.random.PRNGKey(0)
    k1, k2, k3 = jax.random.split(key, 3)

    # Small shapes consistent with the module's forward.
    _check(2, 16, k1)
    # Non-multiple-of-128 N with multi-item batching per grid step (TB > 1 path).
    _check(5, 200, k2)
    # Multi-tile point axis + padding (forces n_tiles_s > 1 with a small target).
    _check(3, 1500, k3, target_points_per_step=1024)

    print("KERNEL_OK")
</pallas_src>

<mosaic_0001>
module attributes {stable_mosaic.version = 11 : i64} {
  func.func @_transform_kernel(%arg0: i32, %arg1: i32, %arg2: memref<24xf32, #tpu.memory_space<smem>>, %arg3: memref<1x3x1x128xf32, #tpu.memory_space<vmem>>, %arg4: memref<1x3x1x128xf32, #tpu.memory_space<vmem>>) attributes {dimension_semantics = [#tpu.dimension_semantics<parallel>, #tpu.dimension_semantics<parallel>], iteration_bounds = array<i64: 2, 1>, scalar_prefetch = 0 : i64, scratch_operands = 0 : i64, tpu.core_type = #tpu.core_type<tc>, window_params = [{transform_indices = @transform_0, window_bounds = array<i64: 24>}, {transform_indices = @transform_1, window_bounds = array<i64: 1, 3, 1, 128>}, {transform_indices = @transform_2, window_bounds = array<i64: 1, 3, 1, 128>}]} {
    %c1_i32 = arith.constant 1 : i32
    %0 = arith.muli %arg0, %c1_i32 : i32
    %c0_i32 = arith.constant 0 : i32
    %1 = arith.addi %0, %c0_i32 : i32
    %c12_i32 = arith.constant 12 : i32
    %2 = arith.muli %1, %c12_i32 : i32
    %c0 = arith.constant 0 : index
    %c0_0 = arith.constant 0 : index
    %c0_1 = arith.constant 0 : index
    %c0_2 = arith.constant 0 : index
    %3 = vector.load %arg3[%c0, %c0_0, %c0_1, %c0_2] : memref<1x3x1x128xf32, #tpu.memory_space<vmem>>, vector<1x1x1x128xf32>
    %4 = vector.shape_cast %3 : vector<1x1x1x128xf32> to vector<1x128xf32>
    %c0_3 = arith.constant 0 : index
    %c1 = arith.constant 1 : index
    %c0_4 = arith.constant 0 : index
    %c0_5 = arith.constant 0 : index
    %5 = vector.load %arg3[%c0_3, %c1, %c0_4, %c0_5] : memref<1x3x1x128xf32, #tpu.memory_space<vmem>>, vector<1x1x1x128xf32>
    %6 = vector.shape_cast %5 : vector<1x1x1x128xf32> to vector<1x128xf32>
    %c0_6 = arith.constant 0 : index
    %c2 = arith.constant 2 : index
    %c0_7 = arith.constant 0 : index
    %c0_8 = arith.constant 0 : index
    %7 = vector.load %arg3[%c0_6, %c2, %c0_7, %c0_8] : memref<1x3x1x128xf32, #tpu.memory_space<vmem>>, vector<1x1x1x128xf32>
    %8 = vector.shape_cast %7 : vector<1x1x1x128xf32> to vector<1x128xf32>
    %c0_i32_9 = arith.constant 0 : i32
    %9 = arith.addi %2, %c0_i32_9 : i32
    %10 = arith.index_cast %9 : i32 to index
    %11 = memref.load %arg2[%10] : memref<24xf32, #tpu.memory_space<smem>>
    %c1_i32_10 = arith.constant 1 : i32
    %12 = arith.addi %2, %c1_i32_10 : i32
    %13 = arith.index_cast %12 : i32 to index
    %14 = memref.load %arg2[%13] : memref<24xf32, #tpu.memory_space<smem>>
    %c2_i32 = arith.constant 2 : i32
    %15 = arith.addi %2, %c2_i32 : i32
    %16 = arith.index_cast %15 : i32 to index
    %17 = memref.load %arg2[%16] : memref<24xf32, #tpu.memory_space<smem>>
    %c3_i32 = arith.constant 3 : i32
    %18 = arith.addi %2, %c3_i32 : i32
    %19 = arith.index_cast %18 : i32 to index
    %20 = memref.load %arg2[%19] : memref<24xf32, #tpu.memory_space<smem>>
    %c4_i32 = arith.constant 4 : i32
    %21 = arith.addi %2, %c4_i32 : i32
    %22 = arith.index_cast %21 : i32 to index
    %23 = memref.load %arg2[%22] : memref<24xf32, #tpu.memory_space<smem>>
    %c5_i32 = arith.constant 5 : i32
    %24 = arith.addi %2, %c5_i32 : i32
    %25 = arith.index_cast %24 : i32 to index
    %26 = memref.load %arg2[%25] : memref<24xf32, #tpu.memory_space<smem>>
    %c6_i32 = arith.constant 6 : i32
    %27 = arith.addi %2, %c6_i32 : i32
    %28 = arith.index_cast %27 : i32 to index
    %29 = memref.load %arg2[%28] : memref<24xf32, #tpu.memory_space<smem>>
    %c7_i32 = arith.constant 7 : i32
    %30 = arith.addi %2, %c7_i32 : i32
    %31 = arith.index_cast %30 : i32 to index
    %32 = memref.load %arg2[%31] : memref<24xf32, #tpu.memory_space<smem>>
    %c8_i32 = arith.constant 8 : i32
    %33 = arith.addi %2, %c8_i32 : i32
    %34 = arith.index_cast %33 : i32 to index
    %35 = memref.load %arg2[%34] : memref<24xf32, #tpu.memory_space<smem>>
    %c9_i32 = arith.constant 9 : i32
    %36 = arith.addi %2, %c9_i32 : i32
    %37 = arith.index_cast %36 : i32 to index
    %38 = memref.load %arg2[%37] : memref<24xf32, #tpu.memory_space<smem>>
    %c10_i32 = arith.constant 10 : i32
    %39 = arith.addi %2, %c10_i32 : i32
    %40 = arith.index_cast %39 : i32 to index
    %41 = memref.load %arg2[%40] : memref<24xf32, #tpu.memory_space<smem>>
    %c11_i32 = arith.constant 11 : i32
    %42 = arith.addi %2, %c11_i32 : i32
    %43 = arith.index_cast %42 : i32 to index
    %44 = memref.load %arg2[%43] : memref<24xf32, #tpu.memory_space<smem>>
    %45 = vector.broadcast %11 : f32 to vector<1x128xf32>
    %46 = arith.mulf %45, %4 : vector<1x128xf32>
    %47 = vector.broadcast %14 : f32 to vector<1x128xf32>
    %48 = arith.mulf %47, %6 : vector<1x128xf32>
    %49 = arith.addf %46, %48 : vector<1x128xf32>
    %50 = vector.broadcast %17 : f32 to vector<1x128xf32>
    %51 = arith.mulf %50, %8 : vector<1x128xf32>
    %52 = arith.addf %49, %51 : vector<1x128xf32>
    %53 = vector.broadcast %38 : f32 to vector<1x128xf32>
    %54 = arith.addf %52, %53 : vector<1x128xf32>
    %c0_11 = arith.constant 0 : index
    %c0_12 = arith.constant 0 : index
    %c0_13 = arith.constant 0 : index
    %c0_14 = arith.constant 0 : index
    %55 = vector.load %arg4[%c0_11, %c0_12, %c0_13, %c0_14] : memref<1x3x1x128xf32, #tpu.memory_space<vmem>>, vector<1x1x1x128xf32>
    %56 = vector.shape_cast %55 : vector<1x1x1x128xf32> to vector<1x128xf32>
    %57 = vector.shape_cast %54 : vector<1x128xf32> to vector<1x1x1x128xf32>
    tpu.vector_store %arg4[%c0_11, %c0_12, %c0_13, %c0_14], %57 {strides = array<i32>} : memref<1x3x1x128xf32, #tpu.memory_space<vmem>>, vector<1x1x1x128xf32>,
    %58 = vector.broadcast %20 : f32 to vector<1x128xf32>
    %59 = arith.mulf %58, %4 : vector<1x128xf32>
    %60 = vector.broadcast %23 : f32 to vector<1x128xf32>
    %61 = arith.mulf %60, %6 : vector<1x128xf32>
    %62 = arith.addf %59, %61 : vector<1x128xf32>
    %63 = vector.broadcast %26 : f32 to vector<1x128xf32>
    %64 = arith.mulf %63, %8 : vector<1x128xf32>
    %65 = arith.addf %62, %64 : vector<1x128xf32>
    %66 = vector.broadcast %41 : f32 to vector<1x128xf32>
    %67 = arith.addf %65, %66 : vector<1x128xf32>
    %c0_15 = arith.constant 0 : index
    %c1_16 = arith.constant 1 : index
    %c0_17 = arith.constant 0 : index
    %c0_18 = arith.constant 0 : index
    %68 = vector.load %arg4[%c0_15, %c1_16, %c0_17, %c0_18] : memref<1x3x1x128xf32, #tpu.memory_space<vmem>>, vector<1x1x1x128xf32>
    %69 = vector.shape_cast %68 : vector<1x1x1x128xf32> to vector<1x128xf32>
    %70 = vector.shape_cast %67 : vector<1x128xf32> to vector<1x1x1x128xf32>
    tpu.vector_store %arg4[%c0_15, %c1_16, %c0_17, %c0_18], %70 {strides = array<i32>} : memref<1x3x1x128xf32, #tpu.memory_space<vmem>>, vector<1x1x1x128xf32>,
    %71 = vector.broadcast %29 : f32 to vector<1x128xf32>
    %72 = arith.mulf %71, %4 : vector<1x128xf32>
    %73 = vector.broadcast %32 : f32 to vector<1x128xf32>
    %74 = arith.mulf %73, %6 : vector<1x128xf32>
    %75 = arith.addf %72, %74 : vector<1x128xf32>
    %76 = vector.broadcast %35 : f32 to vector<1x128xf32>
    %77 = arith.mulf %76, %8 : vector<1x128xf32>
    %78 = arith.addf %75, %77 : vector<1x128xf32>
    %79 = vector.broadcast %44 : f32 to vector<1x128xf32>
    %80 = arith.addf %78, %79 : vector<1x128xf32>
    %c0_19 = arith.constant 0 : index
    %c2_20 = arith.constant 2 : index
    %c0_21 = arith.constant 0 : index
    %c0_22 = arith.constant 0 : index
    %81 = vector.load %arg4[%c0_19, %c2_20, %c0_21, %c0_22] : memref<1x3x1x128xf32, #tpu.memory_space<vmem>>, vector<1x1x1x128xf32>
    %82 = vector.shape_cast %81 : vector<1x1x1x128xf32> to vector<1x128xf32>
    %83 = vector.shape_cast %80 : vector<1x128xf32> to vector<1x1x1x128xf32>
    tpu.vector_store %arg4[%c0_19, %c2_20, %c0_21, %c0_22], %83 {strides = array<i32>} : memref<1x3x1x128xf32, #tpu.memory_space<vmem>>, vector<1x1x1x128xf32>,
    return
  }
  func.func @transform_0(%arg0: i32, %arg1: i32) -> i32 {
    %c0_i32 = arith.constant 0 : i32
    %c0_i32_0 = arith.constant 0 : i32
    return %c0_i32 : i32
  }
  func.func @transform_1(%arg0: i32, %arg1: i32) -> (i32, i32, i32, i32) {
    %c0_i32 = arith.constant 0 : i32
    %c0_i32_0 = arith.constant 0 : i32
    %c0_i32_1 = arith.constant 0 : i32
    return %arg0, %c0_i32, %arg1, %c0_i32_0 : i32, i32, i32, i32
  }
  func.func @transform_2(%arg0: i32, %arg1: i32) -> (i32, i32, i32, i32) {
    %c0_i32 = arith.constant 0 : i32
    %c0_i32_0 = arith.constant 0 : i32
    %c0_i32_1 = arith.constant 0 : i32
    return %arg0, %c0_i32, %arg1, %c0_i32_0 : i32, i32, i32, i32
  }
}

</mosaic_0001>

<llo_original>
// kernel: tpu_custom_call.1
$region0: #{tpu_custom_call.1}
  #allocation0 [shape = 'u32[]', space=smem, size = 0x4, offset = 0x4, fixed_abs, tag = 'smem constant byte address 0x4 - core index']
  #allocation1 [shape = 'u32[144,128]{1,0:T(1,128)}', space=vmem, size = 0x12000, scoped, tag = 'internal scratch']
  %s0 = inlined_call_operand.hbm [shape: f32[24], index: 0, kind: input, shape index: {}]
  %s1 = inlined_call_operand.hbm [shape: f32[2,3,1,128], index: 1, kind: input, shape index: {}]
  %s2 = inlined_call_operand.hbm [shape: f32[2,3,1,128], index: 2, kind: output, shape index: {}]
  %s3 = sld [smem:[#allocation0]]
  $region49: #{tpu_custom_call.1} parent=0
    _
  %s5 = ssub.s32 1, %s3
  %s6 = scalar_select 0, %s5, %s3
  $region1: #{tpu_custom_call.1} parent=0
    #allocation2 [shape = 'u8[512]{0}', space=smem, size = 0x200, scoped, tag = 'input window, operand 0, single buffered']
    #allocation3 [shape = 's32[2]{0}', space=sflag, size = 0x8, scoped, tag = 'scoped memory for tpu_custom_call.1']
    #allocation4 [shape = 's32[2]{0}', space=sflag, size = 0x8, scoped, tag = 'scoped memory for tpu_custom_call.1']
    #allocation5 [shape = 's32[2]{0}', space=sflag, size = 0x8, scoped, tag = 'scoped memory for tpu_custom_call.1']
    #allocation6 [shape = 'u8[3072]{0}', space=vmem, size = 0xc00, scoped, tag = 'input window, operand 1']
    #allocation7 [shape = 'u8[3072]{0}', space=vmem, size = 0xc00, scoped, tag = 'output window, operand 0']
    %7 = vsyncpa [#allocation5], 0
    %8 = vsyncpa [#allocation3], 0
    %s9 = scalar_lea.sflag [#allocation3], 1
    %10 = vsyncpa %s9, 0
    %11 = vsyncpa [#allocation4], 0
    %s12 = scalar_lea.sflag [#allocation4], 1
    %13 = vsyncpa %s12, 0
    loop: start=0, step=1, limit=4
    $region2: #{tpu_custom_call.1} parent=1 // loop_pre_header
      _
    $region3: #{tpu_custom_call.1} parent=1 // loop_header
      %s15 = sphi 0, %s19
      %p16 = scmp.ge.s32.totalorder %s15, 4
      %s22 = sphi 0, %s34
      %s23 = sphi 0, %s30
      %s24 = sphi 0, %s22
      %s25 = sphi 0, %s23
      %s26 = sphi 0, %s24
      %s27 = sphi 0, %s25
      %s35 = sphi 0, %s35
      %s37 = sphi 0, %s35
      %s38 = sphi 0, %s37
      %s52 = sphi 0, %s38
      %s60 = sphi 0, %s62
      %s63 = sphi 0, %s60
      %s64 = sphi 0, %s63
      %s80 = sphi 0, %s64
      %s88 = sphi 0, %s90
      %s91 = sphi 0, %s88
      %s92 = sphi 0, %s91
      %s108 = sphi 0, %s92
    $region4: #{tpu_custom_call.1} parent=1 // loop_header_branch
      %18 = sbr.rel (%p16) target = $region8
    $region5: #{tpu_custom_call.1} parent=1 // loop_body
      %s20 = ssub.s32 %s15, 1
      %s21 = ssub.s32 %s15, 2
      %s28 = sadd.s32 1, %s23
      %p29 = scmp.ge.s32.totalorder %s28, 1
      %s30 = scalar_select %p29, 0, %s28
      %s31 = sadd.s32 1, %s22
      %s32 = scalar_select %p29, %s31, %s22
      %p33 = scmp.ge.s32.totalorder %s32, 2
      %s34 = scalar_select %p33, 0, %s32
      %s36 = sadd.s32 %s35, 1
      %p39 = scmp.eq.s32.totalorder %s15, 1
      %p40 = scmp.ne.s32.totalorder %s35, %s37
      %p41 = scmp.eq.s32.totalorder %s15, 0
      %p42 = por %p40, %p41
      %p43 = scmp.ne.s32.totalorder %s35, %s37
      %p44 = scmp.eq.s32.totalorder %s20, 1
      %p45 = por %p43, %p44
      %p46 = scmp.ne.s32.totalorder %s37, %s38
      %p47 = scmp.eq.s32.totalorder %s20, 0
      %p48 = por %p46, %p47
      %p49 = scmp.ne.s32.totalorder %s37, %s38
      %p50 = scmp.eq.s32.totalorder %s21, 1
      %p51 = por %p49, %p50
      %p53 = scmp.ne.s32.totalorder %s38, %s52
      %p54 = scmp.eq.s32.totalorder %s21, 0
      %p55 = por %p53, %p54
      %s56 = ssub.s32 %s22, %s34
      %s57 = ssub.s32 %s23, %s30
      %s58 = sor.u32 %s56, %s57
      %p59 = scmp.eq.s32.totalorder %s58, 0
      %s61 = sadd.s32 %s60, 1
      %s62 = scalar_select %p59, %s60, %s61
      %p65 = pneg %p59
      %p66 = scmp.eq.s32.totalorder %s15, 1
      %p67 = por %p65, %p66
      %p68 = scmp.ne.s32.totalorder %s60, %s63
      %p69 = scmp.eq.s32.totalorder %s15, 0
      %p70 = por %p68, %p69
      %p71 = scmp.ne.s32.totalorder %s60, %s63
      %p72 = scmp.eq.s32.totalorder %s20, 1
      %p73 = por %p71, %p72
      %p74 = scmp.ne.s32.totalorder %s63, %s64
      %p75 = scmp.eq.s32.totalorder %s20, 0
      %p76 = por %p74, %p75
      %p77 = scmp.ne.s32.totalorder %s63, %s64
      %p78 = scmp.eq.s32.totalorder %s21, 1
      %p79 = por %p77, %p78
      %p81 = scmp.ne.s32.totalorder %s64, %s80
      %p82 = scmp.eq.s32.totalorder %s21, 0
      %p83 = por %p81, %p82
      %s84 = ssub.s32 %s22, %s34
      %s85 = ssub.s32 %s23, %s30
      %s86 = sor.u32 %s84, %s85
      %p87 = scmp.eq.s32.totalorder %s86, 0
      %s89 = sadd.s32 %s88, 1
      %s90 = scalar_select %p87, %s88, %s89
      %p93 = pneg %p87
      %p94 = scmp.eq.s32.totalorder %s15, 1
      %p95 = por %p93, %p94
      %p96 = scmp.ne.s32.totalorder %s88, %s91
      %p97 = scmp.eq.s32.totalorder %s15, 0
      %p98 = por %p96, %p97
      %p99 = scmp.ne.s32.totalorder %s88, %s91
      %p100 = scmp.eq.s32.totalorder %s20, 1
      %p101 = por %p99, %p100
      %p102 = scmp.ne.s32.totalorder %s91, %s92
      %p103 = scmp.eq.s32.totalorder %s20, 0
      %p104 = por %p102, %p103
      %p105 = scmp.ne.s32.totalorder %s91, %s92
      %p106 = scmp.eq.s32.totalorder %s21, 1
      %p107 = por %p105, %p106
      %p109 = scmp.ne.s32.totalorder %s92, %s108
      %p110 = scmp.eq.s32.totalorder %s21, 0
      %p111 = por %p109, %p110
      %p112 = scmp.le.s32.totalorder 1, %s15
      %p113 = scmp.lt.s32.totalorder %s15, 3
      %p114 = pnand %p112, %p113
      %p115 = pneg %p114
      // Predicated region
      $region9: #{tpu_custom_call.1} parent=5 // pred_check
        _
      $region10: #{tpu_custom_call.1} parent=5 // pred_check_branch
        %117 = sbr.rel (%p114) target = $region12
      $region11: #{tpu_custom_call.1} parent=5 // pred_region
        %s118 = ssub.s32 %s15, 1
        // Predicated region
        $region13: #{tpu_custom_call.1} parent=11 // pred_check
          %p119 = pneg %p48
        $region14: #{tpu_custom_call.1} parent=11 // pred_check_branch
          %121 = sbr.rel (%p119) target = $region16
        $region15: #{tpu_custom_call.1} parent=11 // pred_region
          %s123 = ssub.s32 16, 16
          %124 = vsyncadd [#allocation5], %s123
          %127 = dma.hbm_to_smem %s0, 16, [#allocation2], [#allocation5]
        $region16: #{tpu_custom_call.1} parent=11 // pred_fallthru
          _
      $region12: #{tpu_custom_call.1} parent=5 // pred_fallthru
        _
      %p128 = scmp.lt.s32.totalorder %s15, 2
      // Predicated region
      $region17: #{tpu_custom_call.1} parent=5 // pred_check
        %p129 = pneg %p128
      $region18: #{tpu_custom_call.1} parent=5 // pred_check_branch
        %131 = sbr.rel (%p129) target = $region20
      $region19: #{tpu_custom_call.1} parent=5 // pred_region
        // Predicated region
        $region21: #{tpu_custom_call.1} parent=19 // pred_check
          %p132 = pneg %p70
        $region22: #{tpu_custom_call.1} parent=19 // pred_check_branch
          %134 = sbr.rel (%p132) target = $region24
        $region23: #{tpu_custom_call.1} parent=19 // pred_region
          %s135 = sand.u32 %s60, 1
          %s136 = scalar_lea.sflag [#allocation3], %s135
          %s137 = sand.u32 %s60, 1
          %s138 = smul.addr %s137, 3
          %s139 = scalar_lea.vmem [#allocation6], %s138
          %s141 = ssub.s32 48, 48
          %142 = vsyncadd %s136, %s141
          %s143 = smul.addr %s22, 3
          %s144 = sadd.s32 %s23, %s143
          %s145 = smul.addr %s144, 16
          %s146 = scalar_lea.hbm %s1, %s145
          %s147 = sshll.u32 %s139, 4
          %s148 = int_to_ptr.vmem [resolvable:$true] %s147
          %153 = dma.hbm_to_vmem [thread:$0]  %s146, 48, %s148, %s136, 16, 16, 1
        $region24: #{tpu_custom_call.1} parent=19 // pred_fallthru
          _
      $region20: #{tpu_custom_call.1} parent=5 // pred_fallthru
        _
      %p154 = scmp.le.s32.totalorder 1, %s15
      %p155 = scmp.lt.s32.totalorder %s15, 3
      %p156 = pnand %p154, %p155
      %p157 = pneg %p156
      // Predicated region
      $region25: #{tpu_custom_call.1} parent=5 // pred_check
        _
      $region26: #{tpu_custom_call.1} parent=5 // pred_check_branch
        %159 = sbr.rel (%p156) target = $region28
      $region27: #{tpu_custom_call.1} parent=5 // pred_region
        %s160 = ssub.s32 %s15, 1
        // Predicated region
        $region29: #{tpu_custom_call.1} parent=27 // pred_check
          %p161 = pneg %p48
        $region30: #{tpu_custom_call.1} parent=27 // pred_check_branch
          %163 = sbr.rel (%p161) target = $region32
        $region31: #{tpu_custom_call.1} parent=27 // pred_region
          %164 = dma.done [#allocation5], 16
        $region32: #{tpu_custom_call.1} parent=27 // pred_fallthru
          _
        %s165 = sand.u32 %s63, 1
        %s166 = scalar_lea.sflag [#allocation3], %s165
        %s167 = sand.u32 %s63, 1
        %s168 = smul.addr %s167, 3
        %s169 = scalar_lea.vmem [#allocation6], %s168
        // Predicated region
        $region33: #{tpu_custom_call.1} parent=27 // pred_check
          %p170 = pneg %p76
        $region34: #{tpu_custom_call.1} parent=27 // pred_check_branch
          %172 = sbr.rel (%p170) target = $region36
        $region35: #{tpu_custom_call.1} parent=27 // pred_region
          %173 = dma.done %s166, 48
        $region36: #{tpu_custom_call.1} parent=27 // pred_fallthru
          _
        %174 = sfence
        %p175 = pneg %p48
        %p176 = pneg %p45
        %s177 = sand.u32 %s63, 1
        %s178 = scalar_lea.sflag [#allocation3], %s177
        %s179 = sand.u32 %s63, 1
        %s180 = smul.addr %s179, 3
        %s181 = scalar_lea.vmem [#allocation6], %s180
        %p182 = pneg %p76
        %p183 = pneg %p73
        %p184 = pneg %p104
        %p185 = pneg %p101
        %s186 = sand.u32 %s91, 1
        %s187 = scalar_lea.sflag [#allocation4], %s186
        %s188 = sand.u32 %s91, 1
        %s189 = smul.addr %s188, 3
        %s190 = scalar_lea.vmem [#allocation7], %s189
        %s191 = smul.u32 %s24, 12
        %v192 = vld [vmem:[%s169] sm:$0x1]
        %s193 = scalar_lea.vmem %s169, 1 [#allocation6]
        %v194 = vld [vmem:[%s193] sm:$0x1]
        %s195 = scalar_lea.vmem %s169, 2 [#allocation6]
        %v196 = vld [vmem:[%s195] sm:$0x1]
        %s197 = sld [smem:[#allocation2 + %s191]]
        %s198 = sadd.s32 %s191, 1
        %s199 = sld [smem:[#allocation2 + %s198]]
        %s200 = sadd.s32 %s191, 2
        %s201 = sld [smem:[#allocation2 + %s200]]
        %s202 = sadd.s32 %s191, 3
        %s203 = sld [smem:[#allocation2 + %s202]]
        %s204 = sadd.s32 %s191, 4
        %s205 = sld [smem:[#allocation2 + %s204]]
        %s206 = sadd.s32 %s191, 5
        %s207 = sld [smem:[#allocation2 + %s206]]
        %s208 = sadd.s32 %s191, 6
        %s209 = sld [smem:[#allocation2 + %s208]]
        %s210 = sadd.s32 %s191, 7
        %s211 = sld [smem:[#allocation2 + %s210]]
        %s212 = sadd.s32 %s191, 8
        %s213 = sld [smem:[#allocation2 + %s212]]
        %s214 = sadd.s32 %s191, 9
        %s215 = sld [smem:[#allocation2 + %s214]]
        %s216 = sadd.s32 %s191, 10
        %s217 = sld [smem:[#allocation2 + %s216]]
        %s218 = sadd.s32 %s191, 11
        %s219 = sld [smem:[#allocation2 + %s218]]
        %v220 = vstv %s197
        %v221 = vmul.f32 %v220, %v192
        %v222 = vstv %s199
        %v223 = vmul.f32 %v222, %v194
        %v224 = vadd.f32 %v221, %v223
        %v225 = vstv %s201
        %v226 = vmul.f32 %v225, %v196
        %v227 = vadd.f32 %v224, %v226
        %v228 = vstv %s215
        %v229 = vadd.f32 %v227, %v228
        %230 = vst [vmem:[%s190] sm:$0x1] %v229
        %v231 = vstv %s203
        %v232 = vmul.f32 %v231, %v192
        %v233 = vstv %s205
        %v234 = vmul.f32 %v233, %v194
        %v235 = vadd.f32 %v232, %v234
        %v236 = vstv %s207
        %v237 = vmul.f32 %v236, %v196
        %v238 = vadd.f32 %v235, %v237
        %v239 = vstv %s217
        %v240 = vadd.f32 %v238, %v239
        %s241 = scalar_lea.vmem %s190, 1 [#allocation7]
        %242 = vst [vmem:[%s241] sm:$0x1] %v240
        %v243 = vstv %s209
        %v244 = vmul.f32 %v243, %v192
        %v245 = vstv %s211
        %v246 = vmul.f32 %v245, %v194
        %v247 = vadd.f32 %v244, %v246
        %v248 = vstv %s213
        %v249 = vmul.f32 %v248, %v196
        %v250 = vadd.f32 %v247, %v249
        %v251 = vstv %s219
        %v252 = vadd.f32 %v250, %v251
        %s253 = scalar_lea.vmem %s190, 2 [#allocation7]
        %254 = vst [vmem:[%s253] sm:$0x1] %v252
        %s255 = sand.u32 %s91, 1
        %s256 = scalar_lea.sflag [#allocation4], %s255
        %s257 = sand.u32 %s91, 1
        %s258 = smul.addr %s257, 3
        %s259 = scalar_lea.vmem [#allocation7], %s258
        // Predicated region
        $region37: #{tpu_custom_call.1} parent=27 // pred_check
          %p260 = pneg %p101
        $region38: #{tpu_custom_call.1} parent=27 // pred_check_branch
          %262 = sbr.rel (%p260) target = $region40
        $region39: #{tpu_custom_call.1} parent=27 // pred_region
          %s264 = ssub.s32 48, 48
          %265 = vsyncadd %s256, %s264
          %s266 = smul.addr %s24, 3
          %s267 = sadd.s32 %s25, %s266
          %s268 = smul.addr %s267, 16
          %s269 = scalar_lea.hbm %s2, %s268
          %s270 = sshll.u32 %s259, 4
          %s271 = int_to_ptr.vmem [resolvable:$true] %s270
          %276 = dma.vmem_to_hbm [thread:$0]  %s271, 48, %s269, %s256, 16, 16, 1
        $region40: #{tpu_custom_call.1} parent=27 // pred_fallthru
          _
      $region28: #{tpu_custom_call.1} parent=5 // pred_fallthru
        _
      %p277 = scmp.le.s32.totalorder 2, %s15
      // Predicated region
      $region41: #{tpu_custom_call.1} parent=5 // pred_check
        %p278 = pneg %p277
      $region42: #{tpu_custom_call.1} parent=5 // pred_check_branch
        %280 = sbr.rel (%p278) target = $region44
      $region43: #{tpu_custom_call.1} parent=5 // pred_region
        %s281 = ssub.s32 %s15, 2
        // Predicated region
        $region45: #{tpu_custom_call.1} parent=43 // pred_check
          %p282 = pneg %p107
        $region46: #{tpu_custom_call.1} parent=43 // pred_check_branch
          %284 = sbr.rel (%p282) target = $region48
        $region47: #{tpu_custom_call.1} parent=43 // pred_region
          %s285 = sand.u32 %s92, 1
          %s286 = scalar_lea.sflag [#allocation4], %s285
          %s287 = sand.u32 %s92, 1
          %s288 = smul.addr %s287, 3
          %s289 = scalar_lea.vmem [#allocation7], %s288
          %290 = dma.done %s286, 48
        $region48: #{tpu_custom_call.1} parent=43 // pred_fallthru
          _
      $region44: #{tpu_custom_call.1} parent=5 // pred_fallthru
        _
    $region6: #{tpu_custom_call.1} parent=1 // loop_footer
      %s19 = sadd.s32 1, %s15
    $region7: #{tpu_custom_call.1} parent=1 // loop_footer_branch
      %14 = sbr.rel target = $region3
    $region8: #{tpu_custom_call.1} parent=1 // loop_exit
      _
    %291 = vsyncpa [#allocation3], 1
    %s292 = scalar_lea.sflag [#allocation3], 1
    %293 = vsyncpa %s292, 1
    %294 = vsyncpa [#allocation4], 1
    %s295 = scalar_lea.sflag [#allocation4], 1
    %296 = vsyncpa %s295, 1
    %297 = vsyncpa [#allocation5], 1
    %s298 = scalar_lea.sflag [#allocation5], 1
    %299 = vsyncpa %s298, 1

</llo_original>
